<compile_context>
chip_gen: v7x
topology: tpu7x:2x2x1
jax: 0.10.0
libtpu: 0.0.40
codegen_flags: <defaults>
</compile_context>

<pallas_src>
import functools
import math

import jax
import jax.numpy as jnp
from jax import lax
from jax.experimental import pallas as pl
from jax.experimental.pallas import tpu as pltpu

BN_EPS = 1e-5
LANE = 128
SUBLANE = 16            # bf16 sublane tile -> pad batch to a multiple of 16


def _round_up(n, m):
    return ((n + m - 1) // m) * m


# ---------------------------------------------------------------------------
# Kernel: one grid step == one layer.  Refs:
#   x  (n_pad, d_pad) f32      constant block index -> fetched once
#   w  (d_pad, d_pad) bf16     this layer's weight tile (streamed per step)
#   sb (2, d_pad)     f32      row0 = BN gamma, row1 = BN beta (final layer: bias)
#   o  (n_pad, d_pad) f32      written only on the last layer
#   h  (n_pad, d_pad) f32      VMEM scratch: running activation (persists)
# ---------------------------------------------------------------------------
def make_mlp_kernel(n_valid, n_pad, num_layers):
    inv_n = 1.0 / float(n_valid)
    last = num_layers - 1

    def kernel(x_ref, w_ref, sb_ref, o_ref, h_ref):
        l = pl.program_id(0)

        @pl.when(l == 0)
        def _():
            h_ref[...] = x_ref[...]

        w = w_ref[...]                                           # bf16 tile
        # Linear (block bias omitted: cancelled exactly by BN batch-mean).
        y = jnp.dot(h_ref[...].astype(w.dtype), w,
                    preferred_element_type=jnp.float32)          # (n_pad, d_pad) f32

        @pl.when(l < last)
        def _():
            gamma = sb_ref[0:1, :]                               # (1, d_pad)
            beta = sb_ref[1:2, :]                                # (1, d_pad)
            # Validity mask over batch rows (padded rows excluded from stats).
            row = lax.broadcasted_iota(jnp.int32, (1, n_pad), 1)
            msk = (row < n_valid).astype(jnp.float32)
            # Batch statistics on the MXU (row-vector matmuls); two-pass
            # centered variance (numerically robust).
            mean = jnp.dot(msk, y, preferred_element_type=jnp.float32) * inv_n
            yc = y - mean
            var = jnp.dot(msk, yc * yc, preferred_element_type=jnp.float32) * inv_n
            scale = gamma * lax.rsqrt(var + BN_EPS)              # rsqrt -> EUP
            # Folded BN affine + ReLU; Dropout(p=0.0) is the identity.
            h_ref[...] = jnp.maximum(yc * scale + beta, 0.0)

        @pl.when(l == last)
        def _():
            o_ref[...] = y + sb_ref[1:2, :]                      # final Linear bias

    return kernel


# ---------------------------------------------------------------------------
# Wrapper: pad batch/features, stream layers with a 1-D grid.
# ---------------------------------------------------------------------------
@functools.partial(jax.jit, static_argnames=("out_dim",))
def mlp_forward(x, w_stack, sb_stack, *, out_dim):
    n, d_in = x.shape
    num_layers, d_pad, _ = w_stack.shape
    n_pad = _round_up(max(n, SUBLANE), SUBLANE)
    x_pad = jnp.zeros((n_pad, d_pad), jnp.float32).at[:n, :d_in].set(
        x.astype(jnp.float32))

    # VMEM budget: 2 double-buffered weight tiles + 2 sb tiles + x + out buffers
    # + activation scratch, with 2x headroom; capped below v7x physical VMEM.
    w_tile = d_pad * d_pad * w_stack.dtype.itemsize
    act = n_pad * d_pad * 4
    need = 2 * w_tile + 2 * (2 * d_pad * 4) + 5 * act
    vmem_limit = int(min(max(2 * need, 16 * 1024 * 1024), 64 * 1024 * 1024))

    flops = 2 * n_pad * d_pad * d_pad * num_layers + 6 * n_pad * d_pad * (num_layers - 1)
    bytes_accessed = (w_stack.size * w_stack.dtype.itemsize + sb_stack.size * 4
                      + x_pad.size * 4 + n_pad * d_pad * 4)
    transcendentals = d_pad * (num_layers - 1)

    out_pad = pl.pallas_call(
        make_mlp_kernel(n, n_pad, num_layers),
        out_shape=jax.ShapeDtypeStruct((n_pad, d_pad), jnp.float32),
        grid_spec=pltpu.PrefetchScalarGridSpec(
            num_scalar_prefetch=0,
            grid=(num_layers,),
            in_specs=[
                pl.BlockSpec((n_pad, d_pad), lambda l: (0, 0)),          # x (fetched once)
                pl.BlockSpec((None, d_pad, d_pad), lambda l: (l, 0, 0)),  # layer weight
                pl.BlockSpec((None, 2, d_pad), lambda l: (l, 0, 0)),      # gamma/beta | bias
            ],
            out_specs=pl.BlockSpec((n_pad, d_pad), lambda l: (0, 0)),
            scratch_shapes=[pltpu.VMEM((n_pad, d_pad), jnp.float32)],     # running activation
        ),
        compiler_params=pltpu.CompilerParams(
            dimension_semantics=("arbitrary",),            # sequential layer dependence
            vmem_limit_bytes=vmem_limit,
        ),
        cost_estimate=pl.CostEstimate(flops=flops, transcendentals=transcendentals,
                                      bytes_accessed=bytes_accessed),
    )(x_pad, w_stack, sb_stack)
    return out_pad[:n, :out_dim]


# ---------------------------------------------------------------------------
# Parameter construction (deterministic, PyTorch-style Linear init). Block
# Linear biases ARE created but only used by the reference (they cancel under
# batch-stat BN). BN gamma/beta randomized (PyTorch defaults 1/0) so the affine
# path is actually exercised by the check.
# ---------------------------------------------------------------------------
def init_mlp_params(key, input_dim, hidden_dim, num_hidden):
    blocks = []
    in_dim = input_dim
    for _ in range(num_hidden - 1):
        key, kw, kb, kg, kbe = jax.random.split(key, 5)
        bound = 1.0 / math.sqrt(in_dim)
        w = jax.random.uniform(kw, (in_dim, hidden_dim), jnp.float32, -bound, bound)
        b = jax.random.uniform(kb, (hidden_dim,), jnp.float32, -bound, bound)
        g = jax.random.uniform(kg, (hidden_dim,), jnp.float32, 0.5, 1.5)
        be = jax.random.uniform(kbe, (hidden_dim,), jnp.float32, -0.5, 0.5)
        blocks.append((w, b, g, be))
        in_dim = hidden_dim
    key, kw, kb = jax.random.split(key, 3)
    bound = 1.0 / math.sqrt(in_dim)
    final_w = jax.random.uniform(kw, (in_dim, hidden_dim), jnp.float32, -bound, bound)
    final_b = jax.random.uniform(kb, (hidden_dim,), jnp.float32, -bound, bound)
    return blocks, (final_w, final_b)


def pack_params(params, weight_dtype=jnp.bfloat16):
    """Stack + zero-pad into layer-indexed arrays:
       w_stack  (L, D_pad, D_pad) weight_dtype (block biases dropped: cancel in BN)
       sb_stack (L, 2, D_pad) f32  row0=gamma, row1=beta (final layer: Linear bias)."""
    blocks, (final_w, final_b) = params
    dims = [final_w.shape[0], final_w.shape[1]]
    for (w, _b, _g, _be) in blocks:
        dims += [w.shape[0], w.shape[1]]
    d_pad = _round_up(max(dims), LANE)
    num_layers = len(blocks) + 1
    w_stack = jnp.zeros((num_layers, d_pad, d_pad), jnp.float32)
    sb_stack = jnp.zeros((num_layers, 2, d_pad), jnp.float32)
    for i, (w, _b, g, be) in enumerate(blocks):
        w_stack = w_stack.at[i, :w.shape[0], :w.shape[1]].set(w)
        sb_stack = sb_stack.at[i, 0, :g.shape[0]].set(g)
        sb_stack = sb_stack.at[i, 1, :be.shape[0]].set(be)
    w_stack = w_stack.at[num_layers - 1, :final_w.shape[0], :final_w.shape[1]].set(final_w)
    sb_stack = sb_stack.at[num_layers - 1, 1, :final_b.shape[0]].set(final_b)
    return w_stack.astype(weight_dtype), sb_stack


# ---------------------------------------------------------------------------
# Pure-JAX reference mirroring the kernel's storage precision (weights and the
# matmul-input activation rounded to `weight_dtype`, all accumulation / BN math
# in f32). Includes the per-block Linear biases — they cancel under batch-stat
# BatchNorm, so the kernel (which never sees them) must still match.
# ---------------------------------------------------------------------------
def mlp_reference(x, params, weight_dtype=jnp.bfloat16):
    blocks, (final_w, final_b) = params

    def mm(h, w):
        return jnp.dot(h.astype(weight_dtype).astype(jnp.float32),
                       w.astype(weight_dtype).astype(jnp.float32),
                       preferred_element_type=jnp.float32)

    h = x.astype(jnp.float32)
    for (w, b, g, be) in blocks:
        y = mm(h, w) + b[None, :]
        mean = jnp.mean(y, axis=0, keepdims=True)
        var = jnp.mean((y - mean) ** 2, axis=0, keepdims=True)
        h = jnp.maximum((y - mean) * lax.rsqrt(var + BN_EPS) * g[None, :] + be[None, :], 0.0)
    return mm(h, final_w) + final_b[None, :]


if __name__ == "__main__":
    input_dim, hidden_dim, num_hidden = 16, 32, 3
    batch = 8

    key = jax.random.PRNGKey(0)
    kx, kp = jax.random.split(key)
    x = jax.random.normal(kx, (batch, input_dim), jnp.float32)

    params = init_mlp_params(kp, input_dim, hidden_dim, num_hidden)
    w_stack, sb_stack = pack_params(params, weight_dtype=jnp.bfloat16)

    out = mlp_forward(x, w_stack, sb_stack, out_dim=hidden_dim)
    out = jax.block_until_ready(out)

    ref = mlp_reference(x, params, weight_dtype=jnp.bfloat16)
    assert out.shape == (batch, hidden_dim)
    max_err = float(jnp.max(jnp.abs(out - ref)))
    assert jnp.allclose(out, ref, atol=1e-3, rtol=1e-3), max_err

    print("KERNEL_OK")
</pallas_src>

<mosaic_0001>
module attributes {stable_mosaic.version = 11 : i64} {
  func.func @kernel(%arg0: i32, %arg1: memref<16x128xf32, #tpu.memory_space<vmem>>, %arg2: memref<1x128x128xbf16, #tpu.memory_space<vmem>>, %arg3: memref<1x2x128xf32, #tpu.memory_space<vmem>>, %arg4: memref<16x128xf32, #tpu.memory_space<vmem>>, %arg5: memref<16x128xf32, #tpu.memory_space<vmem>>) attributes {dimension_semantics = [#tpu.dimension_semantics<arbitrary>], iteration_bounds = array<i64: 3>, scalar_prefetch = 0 : i64, scratch_operands = 1 : i64, tpu.core_type = #tpu.core_type<tc>, window_params = [{pipeline_mode = #tpu.pipeline_mode<synchronous>, transform_indices = @transform_0, window_bounds = array<i64: 16, 128>}, {transform_indices = @transform_1, window_bounds = array<i64: 1, 128, 128>}, {transform_indices = @transform_2, window_bounds = array<i64: 1, 2, 128>}, {pipeline_mode = #tpu.pipeline_mode<synchronous>, transform_indices = @transform_3, window_bounds = array<i64: 16, 128>}]} {
    %c0_i32 = arith.constant 0 : i32
    %0 = arith.cmpi eq, %arg0, %c0_i32 : i32
    %1 = arith.extui %0 : i1 to i32
    %c0_i32_0 = arith.constant 0 : i32
    %2 = arith.cmpi ne, %1, %c0_i32_0 : i32
    scf.if %2 {
      %c0_8 = arith.constant 0 : index
      %c0_9 = arith.constant 0 : index
      %14 = vector.load %arg1[%c0_8, %c0_9] : memref<16x128xf32, #tpu.memory_space<vmem>>, vector<16x128xf32>
      %c0_10 = arith.constant 0 : index
      %c0_11 = arith.constant 0 : index
      %15 = vector.load %arg5[%c0_10, %c0_11] : memref<16x128xf32, #tpu.memory_space<vmem>>, vector<16x128xf32>
      tpu.vector_store %arg5[%c0_10, %c0_11], %14 {strides = array<i32>} : memref<16x128xf32, #tpu.memory_space<vmem>>, vector<16x128xf32>,
    } else {
    }
    %c0 = arith.constant 0 : index
    %c0_1 = arith.constant 0 : index
    %c0_2 = arith.constant 0 : index
    %3 = vector.load %arg2[%c0, %c0_1, %c0_2] : memref<1x128x128xbf16, #tpu.memory_space<vmem>>, vector<1x128x128xbf16>
    %4 = vector.shape_cast %3 : vector<1x128x128xbf16> to vector<128x128xbf16>
    %c0_3 = arith.constant 0 : index
    %c0_4 = arith.constant 0 : index
    %5 = vector.load %arg5[%c0_3, %c0_4] : memref<16x128xf32, #tpu.memory_space<vmem>>, vector<16x128xf32>
    %6 = arith.truncf %5 : vector<16x128xf32> to vector<16x128xbf16>
    %cst = arith.constant dense<0.000000e+00> : vector<16x128xf32>
    %7 = tpu.matmul %6, %4, %cst {dimension_numbers = #tpu.dot_dimension_numbers<[1], [0], [0], [1], [0, 0, 1, 1], [], []>} : vector<16x128xbf16>, vector<128x128xbf16>, vector<16x128xf32> -> vector<16x128xf32>
    %c2_i32 = arith.constant 2 : i32
    %8 = arith.cmpi slt, %arg0, %c2_i32 : i32
    %9 = arith.extui %8 : i1 to i32
    %c0_i32_5 = arith.constant 0 : i32
    %10 = arith.cmpi ne, %9, %c0_i32_5 : i32
    scf.if %10 {
      %c0_8 = arith.constant 0 : index
      %c0_9 = arith.constant 0 : index
      %c0_10 = arith.constant 0 : index
      %14 = vector.load %arg3[%c0_8, %c0_9, %c0_10] : memref<1x2x128xf32, #tpu.memory_space<vmem>>, vector<1x1x128xf32>
      %15 = vector.shape_cast %14 : vector<1x1x128xf32> to vector<1x128xf32>
      %c0_11 = arith.constant 0 : index
      %c1 = arith.constant 1 : index
      %c0_12 = arith.constant 0 : index
      %16 = vector.load %arg3[%c0_11, %c1, %c0_12] : memref<1x2x128xf32, #tpu.memory_space<vmem>>, vector<1x1x128xf32>
      %17 = vector.shape_cast %16 : vector<1x1x128xf32> to vector<1x128xf32>
      %18 = tpu.iota {dimensions = array<i32: 1>} : vector<1x16xi32>
      %c8_i32 = arith.constant 8 : i32
      %19 = vector.broadcast %c8_i32 : i32 to vector<1x16xi32>
      %20 = arith.cmpi slt, %18, %19 : vector<1x16xi32>
      %21 = arith.extui %20 : vector<1x16xi1> to vector<1x16xi32>
      %22 = arith.sitofp %21 : vector<1x16xi32> to vector<1x16xf32>
      %cst_13 = arith.constant dense<0.000000e+00> : vector<1x128xf32>
      %23 = tpu.matmul %22, %7, %cst_13 {dimension_numbers = #tpu.dot_dimension_numbers<[1], [0], [0], [1], [0, 0, 1, 1], [], []>} : vector<1x16xf32>, vector<16x128xf32>, vector<1x128xf32> -> vector<1x128xf32>
      %cst_14 = arith.constant 1.250000e-01 : f32
      %24 = vector.broadcast %cst_14 : f32 to vector<1x128xf32>
      %25 = arith.mulf %23, %24 : vector<1x128xf32>
      %26 = vector.broadcast %25 : vector<1x128xf32> to vector<16x128xf32>
      %27 = arith.subf %7, %26 : vector<16x128xf32>
      %28 = arith.mulf %27, %27 : vector<16x128xf32>
      %cst_15 = arith.constant dense<0.000000e+00> : vector<1x128xf32>
      %29 = tpu.matmul %22, %28, %cst_15 {dimension_numbers = #tpu.dot_dimension_numbers<[1], [0], [0], [1], [0, 0, 1, 1], [], []>} : vector<1x16xf32>, vector<16x128xf32>, vector<1x128xf32> -> vector<1x128xf32>
      %cst_16 = arith.constant 1.250000e-01 : f32
      %30 = vector.broadcast %cst_16 : f32 to vector<1x128xf32>
      %31 = arith.mulf %29, %30 : vector<1x128xf32>
      %cst_17 = arith.constant 9.99999974E-6 : f32
      %32 = vector.broadcast %cst_17 : f32 to vector<1x128xf32>
      %33 = arith.addf %31, %32 : vector<1x128xf32>
      %34 = math.rsqrt %33 : vector<1x128xf32>
      %35 = arith.mulf %15, %34 : vector<1x128xf32>
      %36 = vector.broadcast %35 : vector<1x128xf32> to vector<16x128xf32>
      %37 = arith.mulf %27, %36 : vector<16x128xf32>
      %38 = vector.broadcast %17 : vector<1x128xf32> to vector<16x128xf32>
      %39 = arith.addf %37, %38 : vector<16x128xf32>
      %cst_18 = arith.constant 0.000000e+00 : f32
      %40 = vector.broadcast %cst_18 : f32 to vector<16x128xf32>
      %41 = arith.maximumf %39, %40 : vector<16x128xf32>
      %c0_19 = arith.constant 0 : index
      %c0_20 = arith.constant 0 : index
      %42 = vector.load %arg5[%c0_19, %c0_20] : memref<16x128xf32, #tpu.memory_space<vmem>>, vector<16x128xf32>
      tpu.vector_store %arg5[%c0_19, %c0_20], %41 {strides = array<i32>} : memref<16x128xf32, #tpu.memory_space<vmem>>, vector<16x128xf32>,
    } else {
    }
    %c2_i32_6 = arith.constant 2 : i32
    %11 = arith.cmpi eq, %arg0, %c2_i32_6 : i32
    %12 = arith.extui %11 : i1 to i32
    %c0_i32_7 = arith.constant 0 : i32
    %13 = arith.cmpi ne, %12, %c0_i32_7 : i32
    scf.if %13 {
      %c0_8 = arith.constant 0 : index
      %c1 = arith.constant 1 : index
      %c0_9 = arith.constant 0 : index
      %14 = vector.load %arg3[%c0_8, %c1, %c0_9] : memref<1x2x128xf32, #tpu.memory_space<vmem>>, vector<1x1x128xf32>
      %15 = vector.shape_cast %14 : vector<1x1x128xf32> to vector<1x128xf32>
      %16 = vector.broadcast %15 : vector<1x128xf32> to vector<16x128xf32>
      %17 = arith.addf %7, %16 : vector<16x128xf32>
      %c0_10 = arith.constant 0 : index
      %c0_11 = arith.constant 0 : index
      %18 = vector.load %arg4[%c0_10, %c0_11] : memref<16x128xf32, #tpu.memory_space<vmem>>, vector<16x128xf32>
      tpu.vector_store %arg4[%c0_10, %c0_11], %17 {strides = array<i32>} : memref<16x128xf32, #tpu.memory_space<vmem>>, vector<16x128xf32>,
    } else {
    }
    return
  }
  func.func @transform_0(%arg0: i32) -> (i32, i32) {
    %c0_i32 = arith.constant 0 : i32
    %c0_i32_0 = arith.constant 0 : i32
    %c0_i32_1 = arith.constant 0 : i32
    return %c0_i32, %c0_i32_0 : i32, i32
  }
  func.func @transform_1(%arg0: i32) -> (i32, i32, i32) {
    %c0_i32 = arith.constant 0 : i32
    %c0_i32_0 = arith.constant 0 : i32
    %c0_i32_1 = arith.constant 0 : i32
    return %arg0, %c0_i32, %c0_i32_0 : i32, i32, i32
  }
  func.func @transform_2(%arg0: i32) -> (i32, i32, i32) {
    %c0_i32 = arith.constant 0 : i32
    %c0_i32_0 = arith.constant 0 : i32
    %c0_i32_1 = arith.constant 0 : i32
    return %arg0, %c0_i32, %c0_i32_0 : i32, i32, i32
  }
  func.func @transform_3(%arg0: i32) -> (i32, i32) {
    %c0_i32 = arith.constant 0 : i32
    %c0_i32_0 = arith.constant 0 : i32
    %c0_i32_1 = arith.constant 0 : i32
    return %c0_i32, %c0_i32_0 : i32, i32
  }
}

</mosaic_0001>

<llo_original>
// kernel: mlp_forward.1
$region0: #{mlp_forward.1}
  #allocation0 [shape = 'u32[]', space=smem, size = 0x4, offset = 0x4, fixed_abs, tag = 'smem constant byte address 0x4 - core index']
  #allocation1 [shape = 'u32[144,128]{1,0:T(1,128)}', space=vmem, size = 0x12000, scoped, tag = 'internal scratch']
  #allocation2 [shape = 'f32[16,128]{1,0:T(8,128)}', space=vmem, size = 0x2000, scoped, tag = 'scratch operand']
  %s0 = inlined_call_operand.vmem [shape: f32[16,128], index: 0, kind: input, shape index: {}]
  %s1 = inlined_call_operand.hbm [shape: bf16[3,128,128], index: 1, kind: input, shape index: {}]
  %s2 = inlined_call_operand.vmem [shape: f32[3,2,128], index: 2, kind: input, shape index: {}]
  %s3 = inlined_call_operand.vmem [shape: f32[16,128], index: 3, kind: output, shape index: {}]
  %s4 = sld [smem:[#allocation0]]
  $region61: #{mlp_forward.1} parent=0
    _
  %s6 = ssub.s32 1, %s4
  %s7 = scalar_select 0, %s6, %s4
  $region1: #{mlp_forward.1} parent=0
    #allocation3 [shape = 'u8[65536]{0}', space=vmem, size = 0x10000, scoped, tag = 'input window, operand 1']
    #allocation4 [shape = 's32[2]{0}', space=sflag, size = 0x8, scoped, tag = 'scoped memory for mlp_forward.1']
    %8 = vsyncpa [#allocation4], 0
    %s9 = scalar_lea.sflag [#allocation4], 1
    %10 = vsyncpa %s9, 0
    loop: start=0, step=1, limit=5
    $region2: #{mlp_forward.1} parent=1 // loop_pre_header
      _
    $region3: #{mlp_forward.1} parent=1 // loop_header
      %s12 = sphi 0, %s16
      %p13 = scmp.ge.s32.totalorder %s12, 5
      %s20 = sphi 0, %s20
      %s22 = sphi 0, %s20
      %s23 = sphi 0, %s22
      %s37 = sphi 0, %s23
      %s43 = sphi 0, %s45
      %s46 = sphi 0, %s43
      %s47 = sphi 0, %s46
      %s63 = sphi 0, %s47
      %s69 = sphi 0, %s71
      %s72 = sphi 0, %s69
      %s73 = sphi 0, %s72
      %s89 = sphi 0, %s73
      %s93 = sphi 0, %s93
      %s95 = sphi 0, %s93
      %s96 = sphi 0, %s95
      %s110 = sphi 0, %s96
    $region4: #{mlp_forward.1} parent=1 // loop_header_branch
      %15 = sbr.rel (%p13) target = $region8
    $region5: #{mlp_forward.1} parent=1 // loop_body
      %s17 = ssub.s32 %s12, 1
      %s18 = ssub.s32 %s12, 2
      %s19 = sadd.s32 %s12, 1
      %s21 = sadd.s32 %s20, 1
      %p24 = scmp.eq.s32.totalorder %s12, 2
      %p25 = scmp.ne.s32.totalorder %s20, %s22
      %p26 = scmp.eq.s32.totalorder %s12, 0
      %p27 = por %p25, %p26
      %p28 = scmp.ne.s32.totalorder %s20, %s22
      %p29 = scmp.eq.s32.totalorder %s17, 2
      %p30 = por %p28, %p29
      %p31 = scmp.ne.s32.totalorder %s22, %s23
      %p32 = scmp.eq.s32.totalorder %s17, 0
      %p33 = por %p31, %p32
      %p34 = scmp.ne.s32.totalorder %s22, %s23
      %p35 = scmp.eq.s32.totalorder %s18, 2
      %p36 = por %p34, %p35
      %p38 = scmp.ne.s32.totalorder %s23, %s37
      %p39 = scmp.eq.s32.totalorder %s18, 0
      %p40 = por %p38, %p39
      %s41 = ssub.s32 %s12, %s19
      %p42 = scmp.eq.s32.totalorder %s41, 0
      %s44 = sadd.s32 %s43, 1
      %s45 = scalar_select %p42, %s43, %s44
      %p48 = pneg %p42
      %p49 = scmp.eq.s32.totalorder %s12, 2
      %p50 = por %p48, %p49
      %p51 = scmp.ne.s32.totalorder %s43, %s46
      %p52 = scmp.eq.s32.totalorder %s12, 0
      %p53 = por %p51, %p52
      %p54 = scmp.ne.s32.totalorder %s43, %s46
      %p55 = scmp.eq.s32.totalorder %s17, 2
      %p56 = por %p54, %p55
      %p57 = scmp.ne.s32.totalorder %s46, %s47
      %p58 = scmp.eq.s32.totalorder %s17, 0
      %p59 = por %p57, %p58
      %p60 = scmp.ne.s32.totalorder %s46, %s47
      %p61 = scmp.eq.s32.totalorder %s18, 2
      %p62 = por %p60, %p61
      %p64 = scmp.ne.s32.totalorder %s47, %s63
      %p65 = scmp.eq.s32.totalorder %s18, 0
      %p66 = por %p64, %p65
      %s67 = ssub.s32 %s12, %s19
      %p68 = scmp.eq.s32.totalorder %s67, 0
      %s70 = sadd.s32 %s69, 1
      %s71 = scalar_select %p68, %s69, %s70
      %p74 = pneg %p68
      %p75 = scmp.eq.s32.totalorder %s12, 2
      %p76 = por %p74, %p75
      %p77 = scmp.ne.s32.totalorder %s69, %s72
      %p78 = scmp.eq.s32.totalorder %s12, 0
      %p79 = por %p77, %p78
      %p80 = scmp.ne.s32.totalorder %s69, %s72
      %p81 = scmp.eq.s32.totalorder %s17, 2
      %p82 = por %p80, %p81
      %p83 = scmp.ne.s32.totalorder %s72, %s73
      %p84 = scmp.eq.s32.totalorder %s17, 0
      %p85 = por %p83, %p84
      %p86 = scmp.ne.s32.totalorder %s72, %s73
      %p87 = scmp.eq.s32.totalorder %s18, 2
      %p88 = por %p86, %p87
      %p90 = scmp.ne.s32.totalorder %s73, %s89
      %p91 = scmp.eq.s32.totalorder %s18, 0
      %p92 = por %p90, %p91
      %s94 = sadd.s32 %s93, 1
      %p97 = scmp.eq.s32.totalorder %s12, 2
      %p98 = scmp.ne.s32.totalorder %s93, %s95
      %p99 = scmp.eq.s32.totalorder %s12, 0
      %p100 = por %p98, %p99
      %p101 = scmp.ne.s32.totalorder %s93, %s95
      %p102 = scmp.eq.s32.totalorder %s17, 2
      %p103 = por %p101, %p102
      %p104 = scmp.ne.s32.totalorder %s95, %s96
      %p105 = scmp.eq.s32.totalorder %s17, 0
      %p106 = por %p104, %p105
      %p107 = scmp.ne.s32.totalorder %s95, %s96
      %p108 = scmp.eq.s32.totalorder %s18, 2
      %p109 = por %p107, %p108
      %p111 = scmp.ne.s32.totalorder %s96, %s110
      %p112 = scmp.eq.s32.totalorder %s18, 0
      %p113 = por %p111, %p112
      %p114 = scmp.le.s32.totalorder 1, %s12
      %p115 = scmp.lt.s32.totalorder %s12, 4
      %p116 = pnand %p114, %p115
      %p117 = pneg %p116
      // Predicated region
      $region9: #{mlp_forward.1} parent=5 // pred_check
        _
      $region10: #{mlp_forward.1} parent=5 // pred_check_branch
        %119 = sbr.rel (%p116) target = $region12
      $region11: #{mlp_forward.1} parent=5 // pred_region
        %s120 = ssub.s32 %s12, 1
        // Predicated region
        $region13: #{mlp_forward.1} parent=11 // pred_check
          %p121 = pneg %p33
        $region14: #{mlp_forward.1} parent=11 // pred_check_branch
          %123 = sbr.rel (%p121) target = $region16
        $region15: #{mlp_forward.1} parent=11 // pred_region
          _
        $region16: #{mlp_forward.1} parent=11 // pred_fallthru
          _
      $region12: #{mlp_forward.1} parent=5 // pred_fallthru
        _
      %p124 = scmp.lt.s32.totalorder %s12, 3
      // Predicated region
      $region17: #{mlp_forward.1} parent=5 // pred_check
        %p125 = pneg %p124
      $region18: #{mlp_forward.1} parent=5 // pred_check_branch
        %127 = sbr.rel (%p125) target = $region20
      $region19: #{mlp_forward.1} parent=5 // pred_region
        // Predicated region
        $region21: #{mlp_forward.1} parent=19 // pred_check
          %p128 = pneg %p53
        $region22: #{mlp_forward.1} parent=19 // pred_check_branch
          %130 = sbr.rel (%p128) target = $region24
        $region23: #{mlp_forward.1} parent=19 // pred_region
          %s131 = sand.u32 %s43, 1
          %s132 = scalar_lea.sflag [#allocation4], %s131
          %s133 = sand.u32 %s43, 1
          %s134 = smul.addr %s133, 64
          %s135 = scalar_lea.vmem [#allocation3], %s134
          %s137 = ssub.s32 1024, 1024
          %138 = vsyncadd %s132, %s137
          %s139 = smul.addr %s12, 16
          %s140 = smul.addr %s139, 64
          %s141 = scalar_lea.hbm %s1, %s140
          %s142 = sshll.u32 %s135, 4
          %s143 = int_to_ptr.vmem [resolvable:$true] %s142
          %148 = dma.hbm_to_vmem [thread:$0]  %s141, 1024, %s143, %s132, 64, 64, 4
        $region24: #{mlp_forward.1} parent=19 // pred_fallthru
          _
        // Predicated region
        $region25: #{mlp_forward.1} parent=19 // pred_check
          %p149 = pneg %p79
        $region26: #{mlp_forward.1} parent=19 // pred_check_branch
          %151 = sbr.rel (%p149) target = $region28
        $region27: #{mlp_forward.1} parent=19 // pred_region
          %p152 = scmp.lt.s32.totalorder %s12, 2
          %s153 = scalar_select %p152, %s12, 2
          %s154 = smul.addr %s153, 2
          %s155 = scalar_lea.vmem %s2, %s154
        $region28: #{mlp_forward.1} parent=19 // pred_fallthru
          _
      $region20: #{mlp_forward.1} parent=5 // pred_fallthru
        _
      %p156 = scmp.le.s32.totalorder 1, %s12
      %p157 = scmp.lt.s32.totalorder %s12, 4
      %p158 = pnand %p156, %p157
      %p159 = pneg %p158
      // Predicated region
      $region29: #{mlp_forward.1} parent=5 // pred_check
        _
      $region30: #{mlp_forward.1} parent=5 // pred_check_branch
        %161 = sbr.rel (%p158) target = $region32
      $region31: #{mlp_forward.1} parent=5 // pred_region
        %s162 = ssub.s32 %s12, 1
        %s163 = sand.u32 %s46, 1
        %s164 = scalar_lea.sflag [#allocation4], %s163
        %s165 = sand.u32 %s46, 1
        %s166 = smul.addr %s165, 64
        %s167 = scalar_lea.vmem [#allocation3], %s166
        // Predicated region
        $region33: #{mlp_forward.1} parent=31 // pred_check
          %p168 = pneg %p59
        $region34: #{mlp_forward.1} parent=31 // pred_check_branch
          %170 = sbr.rel (%p168) target = $region36
        $region35: #{mlp_forward.1} parent=31 // pred_region
          %171 = dma.done %s164, 1024
        $region36: #{mlp_forward.1} parent=31 // pred_fallthru
          _
        %p172 = pneg %p33
        %p173 = pneg %p30
        %s174 = sand.u32 %s46, 1
        %s175 = scalar_lea.sflag [#allocation4], %s174
        %s176 = sand.u32 %s46, 1
        %s177 = smul.addr %s176, 64
        %s178 = scalar_lea.vmem [#allocation3], %s177
        %p179 = pneg %p59
        %p180 = pneg %p56
        %p181 = scmp.lt.s32.totalorder %s17, 2
        %s182 = scalar_select %p181, %s17, 2
        %s183 = smul.addr %s182, 2
        %s184 = scalar_lea.vmem %s2, %s183
        %p185 = pneg %p85
        %p186 = pneg %p82
        %p187 = pneg %p106
        %p188 = pneg %p103
        %p189 = scmp.lt.s32.totalorder %s17, 2
        %s190 = scalar_select %p189, %s17, 2
        %s191 = smul.addr %s190, 2
        %s192 = scalar_lea.vmem %s2, %s191
        %p194 = scmp.eq.s32.totalorder %s17, 0
        // Predicated region
        $region37: #{mlp_forward.1} parent=31 // pred_check
          %p195 = pneg %p194
        $region38: #{mlp_forward.1} parent=31 // pred_check_branch
          %197 = sbr.rel (%p195) target = $region40
        $region39: #{mlp_forward.1} parent=31 // pred_region
          %v198 = vld [vmem:[%s0] sm:$0xff]
          %v199 = vld [vmem:[%s0 + $0x8] sm:$0xff]
          %200 = vst [vmem:[#allocation2] sm:$0xff] %v198
          %201 = vst [vmem:[#allocation2 + $0x8] sm:$0xff] %v199
        $region40: #{mlp_forward.1} parent=31 // pred_fallthru
          _
        %v202 = vld [vmem:[%s167] sm:$0xf]
        %v203 = vld [vmem:[%s167 + $0x4] sm:$0xf]
        %v204 = vld [vmem:[%s167 + $0x8] sm:$0xf]
        %v205 = vld [vmem:[%s167 + $0xc] sm:$0xf]
        %v206 = vld [vmem:[%s167 + $0x10] sm:$0xf]
        %v207 = vld [vmem:[%s167 + $0x14] sm:$0xf]
        %v208 = vld [vmem:[%s167 + $0x18] sm:$0xf]
        %v209 = vld [vmem:[%s167 + $0x1c] sm:$0xf]
        %v210 = vld [vmem:[%s167 + $0x20] sm:$0xf]
        %v211 = vld [vmem:[%s167 + $0x24] sm:$0xf]
        %v212 = vld [vmem:[%s167 + $0x28] sm:$0xf]
        %v213 = vld [vmem:[%s167 + $0x2c] sm:$0xf]
        %v214 = vld [vmem:[%s167 + $0x30] sm:$0xf]
        %v215 = vld [vmem:[%s167 + $0x34] sm:$0xf]
        %v216 = vld [vmem:[%s167 + $0x38] sm:$0xf]
        %v217 = vld [vmem:[%s167 + $0x3c] sm:$0xf]
        %v218 = vld [vmem:[#allocation2] sm:$0xff]
        %v219 = vld [vmem:[#allocation2 + $0x8] sm:$0xff]
        %v220 = vpack.c.bf16 %v219, %v218
        %v237 = vunpack.c.l.b16 %v202
        %v238 = vunpack.c.l.b16 %v203
        %v239 = vunpack.c.l.b16 %v204
        %v240 = vunpack.c.l.b16 %v205
        %v241 = vunpack.c.l.b16 %v206
        %v242 = vunpack.c.l.b16 %v207
        %v243 = vunpack.c.l.b16 %v208
        %v244 = vunpack.c.l.b16 %v209
        %v245 = vunpack.c.l.b16 %v210
        %v246 = vunpack.c.l.b16 %v211
        %v247 = vunpack.c.l.b16 %v212
        %v248 = vunpack.c.l.b16 %v213
        %v249 = vunpack.c.l.b16 %v214
        %v250 = vunpack.c.l.b16 %v215
        %v251 = vunpack.c.l.b16 %v216
        %v252 = vunpack.c.l.b16 %v217
        %v253 = vpack.c.b16 %v238, %v237
        %v254 = vpack.c.b16 %v240, %v239
        %v255 = vpack.c.b16 %v242, %v241
        %v256 = vpack.c.b16 %v244, %v243
        %v257 = vpack.c.b16 %v246, %v245
        %v258 = vpack.c.b16 %v248, %v247
        %v259 = vpack.c.b16 %v250, %v249
        %v260 = vpack.c.b16 %v252, %v251
        %269 = vmatprep.subr.bf16.mxu0 0
        %270 = vmatpush1.bf16.msra.mxu0 %v253
        %271 = vmatprep.subr.bf16.mxu0 0
        %272 = vmatpush1.bf16.msra.mxu0 %v254
        %273 = vmatprep.subr.bf16.mxu0 0
        %274 = vmatpush1.bf16.msra.mxu0 %v255
        %275 = vmatprep.subr.bf16.mxu0 0
        %276 = vmatpush1.bf16.msra.mxu0 %v256
        %277 = vmatprep.subr.bf16.mxu0 0
        %278 = vmatpush1.bf16.msra.mxu0 %v257
        %279 = vmatprep.subr.bf16.mxu0 0
        %280 = vmatpush1.bf16.msra.mxu0 %v258
        %281 = vmatprep.subr.bf16.mxu0 0
        %282 = vmatpush1.bf16.msra.mxu0 %v259
        %283 = vmatprep.subr.bf16.mxu0 0
        %284 = vmatpush1.bf16.msra.mxu0 %v260
        %285 = vmatprep.subr.bf16.mxu0 0
        %286 = vmatpush1.bf16.msra.mxu0 0
        %287 = vmatprep.subr.bf16.mxu0 0
        %288 = vmatpush1.bf16.msra.mxu0 0
        %289 = vmatprep.subr.bf16.mxu0 0
        %290 = vmatpush1.bf16.msra.mxu0 0
        %291 = vmatprep.subr.bf16.mxu0 0
        %292 = vmatpush1.bf16.msra.mxu0 0
        %293 = vmatprep.subr.bf16.mxu0 0
        %294 = vmatpush1.bf16.msra.mxu0 0
        %295 = vmatprep.subr.bf16.mxu0 0
        %296 = vmatpush1.bf16.msra.mxu0 0
        %297 = vmatprep.subr.bf16.mxu0 0
        %298 = vmatpush1.bf16.msra.mxu0 0
        %299 = vmatprep.subr.bf16.mxu0 0
        %300 = vmatpush1.bf16.msra.mxu0 0
        %301 = vmatprep.mubr.bf16.mxu0 0
        %302 = vmatmul.mubr.bf16.gmra.mrb[0].mxu0 %v220
        %v303 = vpop.f32.mrb[0].mxu0
        %v304 = vadd.f32 0.0, %v303
        %v305 = vpop.f32.mrb[0].mxu0
        %v306 = vpop.f32.mrb[0].mxu0
        %v307 = vadd.f32 0.0, %v306
        %v308 = vpop.f32.mrb[0].mxu0
        %309 = vdwg.mxu0
        %p310 = scmp.lt.s32.totalorder %s17, 2
        // Predicated region
        $region41: #{mlp_forward.1} parent=31 // pred_check
          %p311 = pneg %p310
        $region42: #{mlp_forward.1} parent=31 // pred_check_branch
          %313 = sbr.rel (%p311) target = $region44
        $region43: #{mlp_forward.1} parent=31 // pred_region
          %v314 = vld [vmem:[%s192] sm:$0x1]
          %v315 = vld [vmem:[%s192 + $0x1] sm:$0x1]
          %v316 = vlaneseq
          %v317 = vand.u32 %v316, 127
          %vm318 = vcmp.lt.s32.totalorder %v317, 8
          %v319 = vsel %vm318, 1, 0
          %v320 = vcvt.s32.f32 %v319
          %vm321 = vcmask 130048
          %v323 = vsel %vm321, %v320, 0
          %325 = vmatprep.subr.mxu0 0.0
          %326 = vmatpush1.msra.mxu0 %v304
          %327 = vmatprep.subr.mxu0 0.0
          %328 = vmatpush1.msra.mxu0 %v307
          %329 = vmatprep.subr.mxu0 0.0
          %330 = vmatpush1.msra.mxu0 0.0
          %331 = vmatprep.subr.mxu0 0.0
          %332 = vmatpush1.msra.mxu0 0.0
          %333 = vmatprep.subr.mxu0 0.0
          %334 = vmatpush1.msra.mxu0 0.0
          %335 = vmatprep.subr.mxu0 0.0
          %336 = vmatpush1.msra.mxu0 0.0
          %337 = vmatprep.subr.mxu0 0.0
          %338 = vmatpush1.msra.mxu0 0.0
          %339 = vmatprep.subr.mxu0 0.0
          %340 = vmatpush1.msra.mxu0 0.0
          %341 = vmatprep.subr.mxu0 0.0
          %342 = vmatpush1.msra.mxu0 0.0
          %343 = vmatprep.subr.mxu0 0.0
          %344 = vmatpush1.msra.mxu0 0.0
          %345 = vmatprep.subr.mxu0 0.0
          %346 = vmatpush1.msra.mxu0 0.0
          %347 = vmatprep.subr.mxu0 0.0
          %348 = vmatpush1.msra.mxu0 0.0
          %349 = vmatprep.subr.mxu0 0.0
          %350 = vmatpush1.msra.mxu0 0.0
          %351 = vmatprep.subr.mxu0 0.0
          %352 = vmatpush1.msra.mxu0 0.0
          %353 = vmatprep.subr.mxu0 0.0
          %354 = vmatpush1.msra.mxu0 0.0
          %355 = vmatprep.subr.mxu0 0.0
          %356 = vmatpush1.msra.mxu0 0.0
          %357 = vmatprep.subr.mxu0 0.0
          %358 = vmatpush1.msra.mxu0 0.0
          %359 = vmatprep.subr.mxu0 0.0
          %360 = vmatpush1.msra.mxu0 0.0
          %361 = vmatprep.subr.mxu0 0.0
          %362 = vmatpush1.msra.mxu0 0.0
          %363 = vmatprep.subr.mxu0 0.0
          %364 = vmatpush1.msra.mxu0 0.0
          %365 = vmatprep.subr.mxu0 0.0
          %366 = vmatpush1.msra.mxu0 0.0
          %367 = vmatprep.subr.mxu0 0.0
          %368 = vmatpush1.msra.mxu0 0.0
          %369 = vmatprep.subr.mxu0 0.0
          %370 = vmatpush1.msra.mxu0 0.0
          %371 = vmatprep.subr.mxu0 0.0
          %372 = vmatpush1.msra.mxu0 0.0
          %373 = vmatprep.subr.mxu0 0.0
          %374 = vmatpush1.msra.mxu0 0.0
          %375 = vmatprep.subr.mxu0 0.0
          %376 = vmatpush1.msra.mxu0 0.0
          %377 = vmatprep.subr.mxu0 0.0
          %378 = vmatpush1.msra.mxu0 0.0
          %379 = vmatprep.subr.mxu0 0.0
          %380 = vmatpush1.msra.mxu0 0.0
          %381 = vmatprep.subr.mxu0 0.0
          %382 = vmatpush1.msra.mxu0 0.0
          %383 = vmatprep.subr.mxu0 0.0
          %384 = vmatpush1.msra.mxu0 0.0
          %385 = vmatprep.subr.mxu0 0.0
          %386 = vmatpush1.msra.mxu0 0.0
          %387 = vmatprep.subr.mxu0 0.0
          %388 = vmatpush1.msra.mxu0 0.0
          %389 = vmatprep.mubr.f32.mxu0 0.0
          %390 = vmatmul.mubr.f32.gmra.mrb[0].mxu0 %v323
          %v391 = vpop.f32.mrb[0].mxu0
          %v392 = vadd.f32 0.0, %v391
          %v393 = vpop.f32.mrb[0].mxu0
          %394 = vdwg.mxu0
          %v395 = vmul.f32 %v392, 0.125
          %v396 = vlaneseq
          %v397 = vshrl.u32 %v396, 7
          %v398 = vsub.s32 0, %v397
          %v399 = vrot.slane %v395, %v398
          %v400 = vsub.f32 %v304, %v399
          %v401 = vsub.f32 %v307, %v399
          %v402 = vmul.f32 %v400, %v400
          %v403 = vmul.f32 %v401, %v401
          %404 = vmatprep.subr.mxu0 0.0
          %405 = vmatpush1.msra.mxu0 %v402
          %406 = vmatprep.subr.mxu0 0.0
          %407 = vmatpush1.msra.mxu0 %v403
          %408 = vmatprep.subr.mxu0 0.0
          %409 = vmatpush1.msra.mxu0 0.0
          %410 = vmatprep.subr.mxu0 0.0
          %411 = vmatpush1.msra.mxu0 0.0
          %412 = vmatprep.subr.mxu0 0.0
          %413 = vmatpush1.msra.mxu0 0.0
          %414 = vmatprep.subr.mxu0 0.0
          %415 = vmatpush1.msra.mxu0 0.0
          %416 = vmatprep.subr.mxu0 0.0
          %417 = vmatpush1.msra.mxu0 0.0
          %418 = vmatprep.subr.mxu0 0.0
          %419 = vmatpush1.msra.mxu0 0.0
          %420 = vmatprep.subr.mxu0 0.0
          %421 = vmatpush1.msra.mxu0 0.0
          %422 = vmatprep.subr.mxu0 0.0
          %423 = vmatpush1.msra.mxu0 0.0
          %424 = vmatprep.subr.mxu0 0.0
          %425 = vmatpush1.msra.mxu0 0.0
          %426 = vmatprep.subr.mxu0 0.0
          %427 = vmatpush1.msra.mxu0 0.0
          %428 = vmatprep.subr.mxu0 0.0
          %429 = vmatpush1.msra.mxu0 0.0
          %430 = vmatprep.subr.mxu0 0.0
          %431 = vmatpush1.msra.mxu0 0.0
          %432 = vmatprep.subr.mxu0 0.0
          %433 = vmatpush1.msra.mxu0 0.0
          %434 = vmatprep.subr.mxu0 0.0
          %435 = vmatpush1.msra.mxu0 0.0
          %436 = vmatprep.subr.mxu0 0.0
          %437 = vmatpush1.msra.mxu0 0.0
          %438 = vmatprep.subr.mxu0 0.0
          %439 = vmatpush1.msra.mxu0 0.0
          %440 = vmatprep.subr.mxu0 0.0
          %441 = vmatpush1.msra.mxu0 0.0
          %442 = vmatprep.subr.mxu0 0.0
          %443 = vmatpush1.msra.mxu0 0.0
          %444 = vmatprep.subr.mxu0 0.0
          %445 = vmatpush1.msra.mxu0 0.0
          %446 = vmatprep.subr.mxu0 0.0
          %447 = vmatpush1.msra.mxu0 0.0
          %448 = vmatprep.subr.mxu0 0.0
          %449 = vmatpush1.msra.mxu0 0.0
          %450 = vmatprep.subr.mxu0 0.0
          %451 = vmatpush1.msra.mxu0 0.0
          %452 = vmatprep.subr.mxu0 0.0
          %453 = vmatpush1.msra.mxu0 0.0
          %454 = vmatprep.subr.mxu0 0.0
          %455 = vmatpush1.msra.mxu0 0.0
          %456 = vmatprep.subr.mxu0 0.0
          %457 = vmatpush1.msra.mxu0 0.0
          %458 = vmatprep.subr.mxu0 0.0
          %459 = vmatpush1.msra.mxu0 0.0
          %460 = vmatprep.subr.mxu0 0.0
          %461 = vmatpush1.msra.mxu0 0.0
          %462 = vmatprep.subr.mxu0 0.0
          %463 = vmatpush1.msra.mxu0 0.0
          %464 = vmatprep.subr.mxu0 0.0
          %465 = vmatpush1.msra.mxu0 0.0
          %466 = vmatprep.subr.mxu0 0.0
          %467 = vmatpush1.msra.mxu0 0.0
          %468 = vmatprep.mubr.f32.mxu0 0.0
          %469 = vmatmul.mubr.f32.gmra.mrb[0].mxu0 %v323
          %v470 = vpop.f32.mrb[0].mxu0
          %v471 = vadd.f32 0.0, %v470
          %v472 = vpop.f32.mrb[0].mxu0
          %473 = vdwg.mxu0
          %v474 = vmul.f32 %v471, 0.125
          %v475 = vadd.f32 %v474, 1e-05
          %v476 = vrsqrt.pop %v475
          %v477 = vmul.f32 %v314, %v476
          %v478 = vlaneseq
          %v479 = vshrl.u32 %v478, 7
          %v480 = vsub.s32 0, %v479
          %v481 = vrot.slane %v477, %v480
          %v482 = vmul.f32 %v400, %v481
          %v483 = vmul.f32 %v401, %v481
          %v484 = vlaneseq
          %v485 = vshrl.u32 %v484, 7
          %v486 = vsub.s32 0, %v485
          %v487 = vrot.slane %v315, %v486
          %v488 = vadd.f32 %v482, %v487
          %v489 = vadd.f32 %v483, %v487
          %v490 = vmax.f32 %v488, 0.0
          %v491 = vmax.f32 %v489, 0.0
          %492 = vst [vmem:[#allocation2] sm:$0xff] %v490
          %493 = vst [vmem:[#allocation2 + $0x8] sm:$0xff] %v491
        $region44: #{mlp_forward.1} parent=31 // pred_fallthru
          _
        %p494 = scmp.eq.s32.totalorder %s17, 2
        // Predicated region
        $region45: #{mlp_forward.1} parent=31 // pred_check
          %p495 = pneg %p494
        $region46: #{mlp_forward.1} parent=31 // pred_check_branch
          %497 = sbr.rel (%p495) target = $region48
        $region47: #{mlp_forward.1} parent=31 // pred_region
          %v498 = vld [vmem:[%s192 + $0x1] sm:$0x1]
          %v499 = vlaneseq
          %v500 = vshrl.u32 %v499, 7
          %v501 = vsub.s32 0, %v500
          %v502 = vrot.slane %v498, %v501
          %v503 = vadd.f32 %v304, %v502
          %v504 = vadd.f32 %v307, %v502
          %505 = vst [vmem:[%s3] sm:$0xff] %v503
          %506 = vst [vmem:[%s3 + $0x8] sm:$0xff] %v504
        $region48: #{mlp_forward.1} parent=31 // pred_fallthru
          _
        // Predicated region
        $region49: #{mlp_forward.1} parent=31 // pred_check
          %p507 = pneg %p103
        $region50: #{mlp_forward.1} parent=31 // pred_check_branch
          %509 = sbr.rel (%p507) target = $region52
        $region51: #{mlp_forward.1} parent=31 // pred_region
          _
        $region52: #{mlp_forward.1} parent=31 // pred_fallthru
          _
        // Predicated region
        $region53: #{mlp_forward.1} parent=31 // pred_check
          %p510 = pneg %p103
        $region54: #{mlp_forward.1} parent=31 // pred_check_branch
          %512 = sbr.rel (%p510) target = $region56
        $region55: #{mlp_forward.1} parent=31 // pred_region
          _
        $region56: #{mlp_forward.1} parent=31 // pred_fallthru
          _
      $region32: #{mlp_forward.1} parent=5 // pred_fallthru
        _
      %p513 = scmp.le.s32.totalorder 2, %s12
      // Predicated region
      $region57: #{mlp_forward.1} parent=5 // pred_check
        %p514 = pneg %p513
      $region58: #{mlp_forward.1} parent=5 // pred_check_branch
        %516 = sbr.rel (%p514) target = $region60
      $region59: #{mlp_forward.1} parent=5 // pred_region
        %s517 = ssub.s32 %s12, 2
      $region60: #{mlp_forward.1} parent=5 // pred_fallthru
        _
    $region6: #{mlp_forward.1} parent=1 // loop_footer
      %s16 = sadd.s32 1, %s12
    $region7: #{mlp_forward.1} parent=1 // loop_footer_branch
      %11 = sbr.rel target = $region3
    $region8: #{mlp_forward.1} parent=1 // loop_exit
      _
    %518 = vsyncpa [#allocation4], 1
    %s519 = scalar_lea.sflag [#allocation4], 1
    %520 = vsyncpa %s519, 1

</llo_original>
